<compile_context>
chip_gen: v6e
topology: v6e:2x2x1
jax: 0.10.0
libtpu: 0.0.40
codegen_flags: <defaults>
</compile_context>

<pallas_src>
import numpy as np
import jax
import jax.numpy as jnp
from jax.experimental import pallas as pl
from jax.experimental.pallas import tpu as pltpu

KSIZES = (3, 4, 5, 8, 11)
LANE = 128


def _round_up(x, m):
    return (x + m - 1) // m * m


# ----------------------------------------------------------------------------
# Kernel
# ----------------------------------------------------------------------------
def _make_kernel(Bt, T_pad, KE_pad, D):
    def kernel(xc_ref, cw_ref, cb_ref, mask_ref, fcw_ref, fcb_ref, out_ref):
        cw = cw_ref[...]                                  # (KE_pad, D) compute dtype
        cdt = cw.dtype

        # Lane-dense im2col slab built host-side; just fold batch into M.
        xc = xc_ref[...].reshape(Bt * T_pad, KE_pad)      # (Bt*T_pad, KE_pad)

        # One MXU matmul for all five convolutions, f32 accumulation.
        score = jnp.dot(xc, cw, preferred_element_type=jnp.float32)
        score = score.reshape(Bt, T_pad, D)

        # bias + ReLU in f32; zero invalid time rows / padded lanes AFTER the
        # ReLU (valid because ReLU >= 0); max over time == MaxPool2d.
        act = jnp.maximum(score + cb_ref[...][None], 0.0) * mask_ref[...][None]
        feat = jnp.max(act, axis=1)                        # (Bt, D) f32, pad lanes 0

        # FC stack on full zero-padded (D, D) slabs — no in-kernel lane slices.
        fcw = fcw_ref[...]                                 # (3, D, D)
        fcb = fcb_ref[...]                                 # (3, D)    f32
        h1 = jnp.maximum(
            jnp.dot(feat.astype(cdt), fcw[0],
                    preferred_element_type=jnp.float32) + fcb[0:1], 0.0)
        h2 = jnp.maximum(
            jnp.dot(h1.astype(cdt), fcw[1],
                    preferred_element_type=jnp.float32) + fcb[1:2], 0.0)
        out = jnp.dot(h2.astype(cdt), fcw[2],
                      preferred_element_type=jnp.float32) + fcb[2:3]
        out_ref[...] = out                                 # lane-dense (Bt, D) store

    return kernel


# ----------------------------------------------------------------------------
# Tiling: derive Bt from an explicit VMEM budget (v7x-safe 32 MiB scoped).
# ----------------------------------------------------------------------------
def _choose_bt(B, T_pad, KE_pad, D, bytes_in, vmem_budget=32 * 1024 * 1024):
    # Resident weights / mask / biases (assume double-buffered, worst case).
    fixed = 2 * (KE_pad * D * bytes_in            # conv weight slab
                 + 3 * D * D * bytes_in           # FC weight slabs
                 + (T_pad + 1 + 3) * D * 4)       # mask + conv bias + FC biases
    # Per batch-row cost inside one grid step.
    per_row = (2 * T_pad * KE_pad * bytes_in      # double-buffered im2col block
               + 2 * T_pad * D * 4                # score + act f32 temps
               + 4 * D * 4                        # feat / h1 / h2 / out temps
               + 2 * D * 4)                       # double-buffered output block
    avail = max(vmem_budget - fixed, 8 * per_row)
    bt = int(min(128, max(8, (avail // per_row) // 8 * 8)))
    return min(bt, _round_up(B, 8))               # never tile wider than the batch


# ----------------------------------------------------------------------------
# Forward wrapper
# ----------------------------------------------------------------------------
def textcnn_forward(x_nchw, params, compute_dtype=jnp.float32):
    B, _, S, E = x_nchw.shape
    F_ = params['w3'].shape[-1]
    H = params['fc1_w'].shape[0]
    H2 = params['fc2_w'].shape[0]
    OUT = params['lin_w'].shape[0]
    nk = len(KSIZES)
    NF5 = nk * F_
    Kmax = max(KSIZES)
    kmin = min(KSIZES)

    # One common lane-padded feature width for conv-out / FC / output.
    D = _round_up(max(NF5, H, H2, OUT), LANE)
    KE = Kmax * E
    KE_pad = _round_up(KE, LANE)

    T = S - kmin + 1                              # largest conv output length
    T_pad = _round_up(T, 16)                      # f32/bf16 layout friendly
    S_pad = T_pad + Kmax - 1                      # rows touched by im2col window

    bytes_in = jnp.dtype(compute_dtype).itemsize
    Bt = _choose_bt(B, T_pad, KE_pad, D, bytes_in)
    B_pad = _round_up(B, Bt)

    # --- host-side (XLA) im2col: lane-dense slab the kernel matmuls directly.
    x = x_nchw[:, 0]                                            # (B, S, E)
    x_pad = jnp.pad(x, ((0, B_pad - B), (0, S_pad - S), (0, 0)))
    xcol = jnp.concatenate([x_pad[:, i:i + T_pad, :] for i in range(Kmax)],
                           axis=-1)                             # (B_pad, T_pad, KE)
    xcol = jnp.pad(xcol, ((0, 0), (0, 0), (0, KE_pad - KE)))
    xcol = xcol.astype(compute_dtype)

    # --- pack the 5 conv weights / biases into zero-padded lane-dense slabs.
    convw = jnp.zeros((Kmax, E, NF5), jnp.float32)
    for j, k in enumerate(KSIZES):
        convw = convw.at[:k, :, j * F_:(j + 1) * F_].set(params[f'w{k}'])
    convw2d = convw.reshape(KE, NF5)
    convw2d = jnp.pad(convw2d, ((0, KE_pad - KE), (0, D - NF5)))
    convw2d = convw2d.astype(compute_dtype)

    convb = jnp.zeros((1, D), jnp.float32)
    convb = convb.at[0, :NF5].set(
        jnp.concatenate([params[f'b{k}'] for k in KSIZES]))

    # Time-validity mask: (t, j*F+f) valid iff t < S-k_j+1; padded lanes zero.
    mask_np = np.zeros((T_pad, D), np.float32)
    for j, k in enumerate(KSIZES):
        mask_np[:S - k + 1, j * F_:(j + 1) * F_] = 1.0
    mask = jnp.asarray(mask_np)

    # --- pack the 3 FC layers into one (3, D, D) weight slab + (3, D) bias.
    # Kernel feature index p = j*F + f  <->  torch flat index f*5 + j.
    perm = np.array([f * nk + j for j in range(nk) for f in range(F_)])
    fc1_w_k = params['fc1_w'][:, perm].T                        # (NF5, H)
    fcw = jnp.zeros((3, D, D), jnp.float32)
    fcw = fcw.at[0, :NF5, :H].set(fc1_w_k)
    fcw = fcw.at[1, :H, :H2].set(params['fc2_w'].T)
    fcw = fcw.at[2, :H2, :OUT].set(params['lin_w'].T)
    fcw = fcw.astype(compute_dtype)
    fcb = jnp.zeros((3, D), jnp.float32)
    fcb = fcb.at[0, :H].set(params['fc1_b'])
    fcb = fcb.at[1, :H2].set(params['fc2_b'])
    fcb = fcb.at[2, :OUT].set(params['lin_b'])

    kernel = _make_kernel(Bt, T_pad, KE_pad, D)

    in_specs = [
        pl.BlockSpec((Bt, T_pad, KE_pad), lambda b: (b, 0, 0)),  # im2col, batch-tiled
        pl.BlockSpec((KE_pad, D), lambda b: (0, 0)),             # conv weight slab
        pl.BlockSpec((1, D), lambda b: (0, 0)),                  # conv bias
        pl.BlockSpec((T_pad, D), lambda b: (0, 0)),              # validity mask
        pl.BlockSpec((3, D, D), lambda b: (0, 0, 0)),            # FC weight slab
        pl.BlockSpec((3, D), lambda b: (0, 0)),                  # FC bias slab
    ]
    out_specs = pl.BlockSpec((Bt, D), lambda b: (b, 0))          # lane-dense store

    out = pl.pallas_call(
        kernel,
        out_shape=jax.ShapeDtypeStruct((B_pad, D), jnp.float32),
        grid=(B_pad // Bt,),
        in_specs=in_specs,
        out_specs=out_specs,
        compiler_params=pltpu.CompilerParams(
            dimension_semantics=("parallel",)),
    )(xcol, convw2d, convb, mask, fcw, fcb)
    return out[:B, :OUT]


# ----------------------------------------------------------------------------
# Pure-JAX reference (torch semantics) and param init
# ----------------------------------------------------------------------------
def reference_forward(x_nchw, params):
    """Pure-JAX replica of the PyTorch forward (torch ordering)."""
    B, _, S, _ = x_nchw.shape
    x = x_nchw[:, 0]
    pooled = []
    for k in KSIZES:
        w = params[f'w{k}']
        T = S - k + 1
        sc = sum(jnp.einsum('bte,ef->btf', x[:, i:i + T, :], w[i])
                 for i in range(k)) + params[f'b{k}']
        pooled.append(jnp.max(jax.nn.relu(sc), axis=1))          # (B, F)
    # torch: cat((x1..x5), -1) on (B,F,1,1) -> (B,F,1,5) -> view(B, 5F)
    feat = jnp.stack(pooled, axis=-1).reshape(B, -1)
    h1 = jax.nn.relu(feat @ params['fc1_w'].T + params['fc1_b'])
    h2 = jax.nn.relu(h1 @ params['fc2_w'].T + params['fc2_b'])
    return h2 @ params['lin_w'].T + params['lin_b']


def init_params(key, E, F_COUNT, H, OUT):
    keys = jax.random.split(key, 16)
    ki = iter(keys)

    def xavier(k, shape, fan_in, fan_out):
        bound = float(np.sqrt(6.0 / (fan_in + fan_out)))
        return jax.random.uniform(k, shape, jnp.float32, -bound, bound)

    params = {}
    for ksz in KSIZES:
        # torch conv weight is (F, 1, ksz, E); stored here as (ksz, E, F).
        params[f'w{ksz}'] = xavier(next(ki), (ksz, E, F_COUNT),
                                   fan_in=ksz * E, fan_out=F_COUNT * ksz * E)
        bb = 1.0 / np.sqrt(ksz * E)
        params[f'b{ksz}'] = jax.random.uniform(next(ki), (F_COUNT,),
                                               jnp.float32, -bb, bb)
    in1 = len(KSIZES) * F_COUNT
    params['fc1_w'] = xavier(next(ki), (H, in1), in1, H)
    params['fc1_b'] = jax.random.uniform(next(ki), (H,), jnp.float32,
                                         -1 / np.sqrt(in1), 1 / np.sqrt(in1))
    params['fc2_w'] = xavier(next(ki), (H // 2, H), H, H // 2)
    params['fc2_b'] = jax.random.uniform(next(ki), (H // 2,), jnp.float32,
                                         -1 / np.sqrt(H), 1 / np.sqrt(H))
    params['lin_w'] = xavier(next(ki), (OUT, H // 2), H // 2, OUT)
    params['lin_b'] = jax.random.uniform(next(ki), (OUT,), jnp.float32,
                                         -1 / np.sqrt(H // 2), 1 / np.sqrt(H // 2))
    return params


if __name__ == "__main__":
    # Small shapes consistent with the module:
    # batch=2, sentence_max_size=16, word_embedding_dimension=16,
    # textcnn_filter_count=8, hidden_units=32, output_len=4.
    B, S, E = 2, 16, 16
    F_COUNT, H, OUT = 8, 32, 4

    key = jax.random.PRNGKey(0)
    k_x, k_p = jax.random.split(key)
    x_nchw = jax.random.normal(k_x, (B, 1, S, E), jnp.float32)
    params = init_params(k_p, E, F_COUNT, H, OUT)

    ref = jax.block_until_ready(reference_forward(x_nchw, params))

    # f32 path: tight check against the pure-JAX reference.
    out_f32 = jax.block_until_ready(textcnn_forward(x_nchw, params))
    if not np.allclose(np.asarray(out_f32), np.asarray(ref), rtol=1e-4, atol=1e-4):
        raise AssertionError("f32 Pallas kernel mismatches pure-JAX reference")

    # bf16-operand path (recommended default on v6e/v7x, f32 accumulation).
    out_bf16 = jax.block_until_ready(
        textcnn_forward(x_nchw, params, compute_dtype=jnp.bfloat16))
    if not np.allclose(np.asarray(out_bf16), np.asarray(ref), rtol=5e-2, atol=5e-2):
        raise AssertionError("bf16 Pallas kernel deviates too much from reference")

    print("KERNEL_OK")
</pallas_src>

<mosaic_0001>
module attributes {stable_mosaic.version = 11 : i64} {
  func.func @kernel(%arg0: i32, %arg1: memref<8x16x256xf32, #tpu.memory_space<vmem>>, %arg2: memref<256x128xf32, #tpu.memory_space<vmem>>, %arg3: memref<1x128xf32, #tpu.memory_space<vmem>>, %arg4: memref<16x128xf32, #tpu.memory_space<vmem>>, %arg5: memref<3x128x128xf32, #tpu.memory_space<vmem>>, %arg6: memref<3x128xf32, #tpu.memory_space<vmem>>, %arg7: memref<8x128xf32, #tpu.memory_space<vmem>>) attributes {dimension_semantics = [#tpu.dimension_semantics<parallel>], iteration_bounds = array<i64: 1>, scalar_prefetch = 0 : i64, scratch_operands = 0 : i64, tpu.core_type = #tpu.core_type<tc>, window_params = [{transform_indices = @transform_0, window_bounds = array<i64: 8, 16, 256>}, {pipeline_mode = #tpu.pipeline_mode<synchronous>, transform_indices = @transform_1, window_bounds = array<i64: 256, 128>}, {pipeline_mode = #tpu.pipeline_mode<synchronous>, transform_indices = @transform_2, window_bounds = array<i64: 1, 128>}, {pipeline_mode = #tpu.pipeline_mode<synchronous>, transform_indices = @transform_3, window_bounds = array<i64: 16, 128>}, {pipeline_mode = #tpu.pipeline_mode<synchronous>, transform_indices = @transform_4, window_bounds = array<i64: 3, 128, 128>}, {pipeline_mode = #tpu.pipeline_mode<synchronous>, transform_indices = @transform_5, window_bounds = array<i64: 3, 128>}, {transform_indices = @transform_6, window_bounds = array<i64: 8, 128>}]} {
    %c0 = arith.constant 0 : index
    %c0_0 = arith.constant 0 : index
    %0 = vector.load %arg2[%c0, %c0_0] : memref<256x128xf32, #tpu.memory_space<vmem>>, vector<256x128xf32>
    %c0_1 = arith.constant 0 : index
    %c0_2 = arith.constant 0 : index
    %c0_3 = arith.constant 0 : index
    %1 = vector.load %arg1[%c0_1, %c0_2, %c0_3] : memref<8x16x256xf32, #tpu.memory_space<vmem>>, vector<8x16x256xf32>
    %2 = vector.shape_cast %1 : vector<8x16x256xf32> to vector<128x256xf32>
    %cst = arith.constant dense<0.000000e+00> : vector<128x128xf32>
    %3 = tpu.matmul %2, %0, %cst {dimension_numbers = #tpu.dot_dimension_numbers<[1], [0], [0], [1], [0, 0, 1, 1], [], []>} : vector<128x256xf32>, vector<256x128xf32>, vector<128x128xf32> -> vector<128x128xf32>
    %4 = vector.shape_cast %3 : vector<128x128xf32> to vector<8x16x128xf32>
    %c0_4 = arith.constant 0 : index
    %c0_5 = arith.constant 0 : index
    %5 = vector.load %arg3[%c0_4, %c0_5] : memref<1x128xf32, #tpu.memory_space<vmem>>, vector<1x128xf32>
    %6 = vector.shape_cast %5 : vector<1x128xf32> to vector<1x1x128xf32>
    %7 = vector.broadcast %6 : vector<1x1x128xf32> to vector<8x16x128xf32>
    %8 = arith.addf %4, %7 : vector<8x16x128xf32>
    %cst_6 = arith.constant 0.000000e+00 : f32
    %9 = vector.broadcast %cst_6 : f32 to vector<8x16x128xf32>
    %10 = arith.maximumf %8, %9 : vector<8x16x128xf32>
    %c0_7 = arith.constant 0 : index
    %c0_8 = arith.constant 0 : index
    %11 = vector.load %arg4[%c0_7, %c0_8] : memref<16x128xf32, #tpu.memory_space<vmem>>, vector<16x128xf32>
    %12 = vector.shape_cast %11 : vector<16x128xf32> to vector<1x16x128xf32>
    %13 = vector.broadcast %12 : vector<1x16x128xf32> to vector<8x16x128xf32>
    %14 = arith.mulf %10, %13 : vector<8x16x128xf32>
    %cst_9 = arith.constant dense<0xFF800000> : vector<8x128xf32>
    %15 = vector.multi_reduction <maximumf>, %14, %cst_9 [1] : vector<8x16x128xf32> to vector<8x128xf32>
    %c0_10 = arith.constant 0 : index
    %c0_11 = arith.constant 0 : index
    %c0_12 = arith.constant 0 : index
    %16 = vector.load %arg5[%c0_10, %c0_11, %c0_12] : memref<3x128x128xf32, #tpu.memory_space<vmem>>, vector<3x128x128xf32>
    %c0_13 = arith.constant 0 : index
    %c0_14 = arith.constant 0 : index
    %17 = vector.load %arg6[%c0_13, %c0_14] : memref<3x128xf32, #tpu.memory_space<vmem>>, vector<3x128xf32>
    %18 = vector.extract_strided_slice %16 {offsets = [0, 0, 0], sizes = [1, 128, 128], strides = [1, 1, 1]} : vector<3x128x128xf32> to vector<1x128x128xf32>
    %19 = vector.shape_cast %18 : vector<1x128x128xf32> to vector<128x128xf32>
    %cst_15 = arith.constant dense<0.000000e+00> : vector<8x128xf32>
    %20 = tpu.matmul %15, %19, %cst_15 {dimension_numbers = #tpu.dot_dimension_numbers<[1], [0], [0], [1], [0, 0, 1, 1], [], []>} : vector<8x128xf32>, vector<128x128xf32>, vector<8x128xf32> -> vector<8x128xf32>
    %21 = vector.extract_strided_slice %17 {offsets = [0, 0], sizes = [1, 128], strides = [1, 1]} : vector<3x128xf32> to vector<1x128xf32>
    %22 = vector.broadcast %21 : vector<1x128xf32> to vector<8x128xf32>
    %23 = arith.addf %20, %22 : vector<8x128xf32>
    %cst_16 = arith.constant 0.000000e+00 : f32
    %24 = vector.broadcast %cst_16 : f32 to vector<8x128xf32>
    %25 = arith.maximumf %23, %24 : vector<8x128xf32>
    %26 = vector.extract_strided_slice %16 {offsets = [1, 0, 0], sizes = [1, 128, 128], strides = [1, 1, 1]} : vector<3x128x128xf32> to vector<1x128x128xf32>
    %27 = vector.shape_cast %26 : vector<1x128x128xf32> to vector<128x128xf32>
    %cst_17 = arith.constant dense<0.000000e+00> : vector<8x128xf32>
    %28 = tpu.matmul %25, %27, %cst_17 {dimension_numbers = #tpu.dot_dimension_numbers<[1], [0], [0], [1], [0, 0, 1, 1], [], []>} : vector<8x128xf32>, vector<128x128xf32>, vector<8x128xf32> -> vector<8x128xf32>
    %29 = vector.extract_strided_slice %17 {offsets = [1, 0], sizes = [1, 128], strides = [1, 1]} : vector<3x128xf32> to vector<1x128xf32>
    %30 = vector.broadcast %29 : vector<1x128xf32> to vector<8x128xf32>
    %31 = arith.addf %28, %30 : vector<8x128xf32>
    %cst_18 = arith.constant 0.000000e+00 : f32
    %32 = vector.broadcast %cst_18 : f32 to vector<8x128xf32>
    %33 = arith.maximumf %31, %32 : vector<8x128xf32>
    %34 = vector.extract_strided_slice %16 {offsets = [2, 0, 0], sizes = [1, 128, 128], strides = [1, 1, 1]} : vector<3x128x128xf32> to vector<1x128x128xf32>
    %35 = vector.shape_cast %34 : vector<1x128x128xf32> to vector<128x128xf32>
    %cst_19 = arith.constant dense<0.000000e+00> : vector<8x128xf32>
    %36 = tpu.matmul %33, %35, %cst_19 {dimension_numbers = #tpu.dot_dimension_numbers<[1], [0], [0], [1], [0, 0, 1, 1], [], []>} : vector<8x128xf32>, vector<128x128xf32>, vector<8x128xf32> -> vector<8x128xf32>
    %37 = vector.extract_strided_slice %17 {offsets = [2, 0], sizes = [1, 128], strides = [1, 1]} : vector<3x128xf32> to vector<1x128xf32>
    %38 = vector.broadcast %37 : vector<1x128xf32> to vector<8x128xf32>
    %39 = arith.addf %36, %38 : vector<8x128xf32>
    %c0_20 = arith.constant 0 : index
    %c0_21 = arith.constant 0 : index
    %40 = vector.load %arg7[%c0_20, %c0_21] : memref<8x128xf32, #tpu.memory_space<vmem>>, vector<8x128xf32>
    tpu.vector_store %arg7[%c0_20, %c0_21], %39 {strides = array<i32>} : memref<8x128xf32, #tpu.memory_space<vmem>>, vector<8x128xf32>,
    return
  }
  func.func @transform_0(%arg0: i32) -> (i32, i32, i32) {
    %c0_i32 = arith.constant 0 : i32
    %c0_i32_0 = arith.constant 0 : i32
    %c0_i32_1 = arith.constant 0 : i32
    return %arg0, %c0_i32, %c0_i32_0 : i32, i32, i32
  }
  func.func @transform_1(%arg0: i32) -> (i32, i32) {
    %c0_i32 = arith.constant 0 : i32
    %c0_i32_0 = arith.constant 0 : i32
    %c0_i32_1 = arith.constant 0 : i32
    return %c0_i32, %c0_i32_0 : i32, i32
  }
  func.func @transform_2(%arg0: i32) -> (i32, i32) {
    %c0_i32 = arith.constant 0 : i32
    %c0_i32_0 = arith.constant 0 : i32
    %c0_i32_1 = arith.constant 0 : i32
    return %c0_i32, %c0_i32_0 : i32, i32
  }
  func.func @transform_3(%arg0: i32) -> (i32, i32) {
    %c0_i32 = arith.constant 0 : i32
    %c0_i32_0 = arith.constant 0 : i32
    %c0_i32_1 = arith.constant 0 : i32
    return %c0_i32, %c0_i32_0 : i32, i32
  }
  func.func @transform_4(%arg0: i32) -> (i32, i32, i32) {
    %c0_i32 = arith.constant 0 : i32
    %c0_i32_0 = arith.constant 0 : i32
    %c0_i32_1 = arith.constant 0 : i32
    %c0_i32_2 = arith.constant 0 : i32
    return %c0_i32, %c0_i32_0, %c0_i32_1 : i32, i32, i32
  }
  func.func @transform_5(%arg0: i32) -> (i32, i32) {
    %c0_i32 = arith.constant 0 : i32
    %c0_i32_0 = arith.constant 0 : i32
    %c0_i32_1 = arith.constant 0 : i32
    return %c0_i32, %c0_i32_0 : i32, i32
  }
  func.func @transform_6(%arg0: i32) -> (i32, i32) {
    %c0_i32 = arith.constant 0 : i32
    %c0_i32_0 = arith.constant 0 : i32
    return %arg0, %c0_i32 : i32, i32
  }
}

</mosaic_0001>

<llo_original>
// kernel: tpu_custom_call.1
$region0: #{tpu_custom_call.1}
  #allocation0 [shape = 'u32[]', space=smem, size = 0x4, offset = 0x4, fixed_abs, tag = 'smem constant byte address 0x4 - core index']
  #allocation1 [shape = 'u32[144,128]{1,0:T(1,128)}', space=vmem, size = 0x12000, scoped, tag = 'internal scratch']
  %s0 = inlined_call_operand.hbm [shape: f32[8,16,256], index: 0, kind: input, shape index: {}]
  %s1 = inlined_call_operand.hbm [shape: f32[256,128], index: 1, kind: input, shape index: {}]
  %s2 = inlined_call_operand.vmem [shape: f32[1,128], index: 2, kind: input, shape index: {}]
  %s3 = inlined_call_operand.hbm [shape: f32[16,128], index: 3, kind: input, shape index: {}]
  %s4 = inlined_call_operand.hbm [shape: f32[3,128,128], index: 4, kind: input, shape index: {}]
  %s5 = inlined_call_operand.vmem [shape: f32[3,128], index: 5, kind: input, shape index: {}]
  %s6 = inlined_call_operand.hbm [shape: f32[8,128], index: 6, kind: output, shape index: {}]
  %s7 = sld [smem:[#allocation0]]
  $region50: #{tpu_custom_call.1} parent=0
    _
  %s9 = ssub.s32 1, %s7
  %s10 = scalar_select 0, %s9, %s7
  $region1: #{tpu_custom_call.1} parent=0
    #allocation2 [shape = 'u8[131072]{0}', space=vmem, size = 0x20000, scoped, tag = 'input window, operand 0, single buffered']
    #allocation3 [shape = 's32[1]{0}', space=sflag, size = 0x4, scoped, tag = 'scoped memory for tpu_custom_call.1']
    #allocation4 [shape = 's32[1]{0}', space=sflag, size = 0x4, scoped, tag = 'scoped memory for tpu_custom_call.1']
    #allocation5 [shape = 'u8[131072]{0}', space=vmem, size = 0x20000, scoped, tag = 'input window, operand 1, single buffered']
    #allocation6 [shape = 's32[1]{0}', space=sflag, size = 0x4, scoped, tag = 'scoped memory for tpu_custom_call.1']
    #allocation7 [shape = 'u8[8192]{0}', space=vmem, size = 0x2000, scoped, tag = 'input window, operand 3, single buffered']
    #allocation8 [shape = 'u8[196608]{0}', space=vmem, size = 0x30000, scoped, tag = 'input window, operand 4, single buffered']
    #allocation9 [shape = 's32[1]{0}', space=sflag, size = 0x4, scoped, tag = 'scoped memory for tpu_custom_call.1']
    #allocation10 [shape = 'u8[4096]{0}', space=vmem, size = 0x1000, scoped, tag = 'output window, operand 0, single buffered']
    %11 = vsyncpa [#allocation3], 0
    %12 = vsyncpa [#allocation6], 0
    %13 = vsyncpa [#allocation9], 0
    %14 = vsyncpa [#allocation4], 0
    // Predicated region
    $region2: #{tpu_custom_call.1} parent=1 // pred_check
      _
    $region3: #{tpu_custom_call.1} parent=1 // pred_check_branch
      %16 = sbr.rel (0) target = $region5
    $region4: #{tpu_custom_call.1} parent=1 // pred_region
      %s18 = ssub.s32 4096, 4096
      %19 = vsyncadd [#allocation3], %s18
      %s20 = sshll.u32 [#allocation2], 4
      %s21 = int_to_ptr.vmem [resolvable:$true] %s20
      %26 = dma.hbm_to_vmem [thread:$0]  %s0, 4096, %s21, [#allocation3], 256, 256, 16
    $region5: #{tpu_custom_call.1} parent=1 // pred_fallthru
      _
    // Predicated region
    $region6: #{tpu_custom_call.1} parent=1 // pred_check
      _
    $region7: #{tpu_custom_call.1} parent=1 // pred_check_branch
      %28 = sbr.rel (0) target = $region9
    $region8: #{tpu_custom_call.1} parent=1 // pred_region
      %s30 = ssub.s32 4096, 4096
      %31 = vsyncadd [#allocation6], %s30
      %s32 = sshll.u32 [#allocation5], 4
      %s33 = int_to_ptr.vmem [resolvable:$true] %s32
      %38 = dma.hbm_to_vmem [thread:$0]  %s1, 4096, %s33, [#allocation6], 128, 128, 8
    $region9: #{tpu_custom_call.1} parent=1 // pred_fallthru
      _
    // Predicated region
    $region10: #{tpu_custom_call.1} parent=1 // pred_check
      _
    $region11: #{tpu_custom_call.1} parent=1 // pred_check_branch
      %40 = sbr.rel (0) target = $region13
    $region12: #{tpu_custom_call.1} parent=1 // pred_region
      _
    $region13: #{tpu_custom_call.1} parent=1 // pred_fallthru
      _
    // Predicated region
    $region14: #{tpu_custom_call.1} parent=1 // pred_check
      _
    $region15: #{tpu_custom_call.1} parent=1 // pred_check_branch
      %42 = sbr.rel (0) target = $region17
    $region16: #{tpu_custom_call.1} parent=1 // pred_region
      %s44 = ssub.s32 256, 256
      %45 = vsyncadd [#allocation6], %s44
      %s46 = sshll.u32 [#allocation7], 4
      %s47 = int_to_ptr.vmem [resolvable:$true] %s46
      %52 = dma.hbm_to_vmem [thread:$0]  %s3, 256, %s47, [#allocation6], 128, 128, 8
    $region17: #{tpu_custom_call.1} parent=1 // pred_fallthru
      _
    // Predicated region
    $region18: #{tpu_custom_call.1} parent=1 // pred_check
      _
    $region19: #{tpu_custom_call.1} parent=1 // pred_check_branch
      %54 = sbr.rel (0) target = $region21
    $region20: #{tpu_custom_call.1} parent=1 // pred_region
      %s56 = ssub.s32 6144, 6144
      %57 = vsyncadd [#allocation9], %s56
      %s58 = sshll.u32 [#allocation8], 4
      %s59 = int_to_ptr.vmem [resolvable:$true] %s58
      %64 = dma.hbm_to_vmem [thread:$0]  %s4, 6144, %s59, [#allocation9], 128, 128, 8
    $region21: #{tpu_custom_call.1} parent=1 // pred_fallthru
      _
    // Predicated region
    $region22: #{tpu_custom_call.1} parent=1 // pred_check
      _
    $region23: #{tpu_custom_call.1} parent=1 // pred_check_branch
      %66 = sbr.rel (0) target = $region25
    $region24: #{tpu_custom_call.1} parent=1 // pred_region
      _
    $region25: #{tpu_custom_call.1} parent=1 // pred_fallthru
      _
    // Predicated region
    $region26: #{tpu_custom_call.1} parent=1 // pred_check
      _
    $region27: #{tpu_custom_call.1} parent=1 // pred_check_branch
      %68 = sbr.rel (0) target = $region29
    $region28: #{tpu_custom_call.1} parent=1 // pred_region
      %69 = dma.done [#allocation3], 4096
    $region29: #{tpu_custom_call.1} parent=1 // pred_fallthru
      _
    // Predicated region
    $region30: #{tpu_custom_call.1} parent=1 // pred_check
      _
    $region31: #{tpu_custom_call.1} parent=1 // pred_check_branch
      %71 = sbr.rel (0) target = $region33
    $region32: #{tpu_custom_call.1} parent=1 // pred_region
      %72 = dma.done [#allocation6], 4096
    $region33: #{tpu_custom_call.1} parent=1 // pred_fallthru
      _
    // Predicated region
    $region34: #{tpu_custom_call.1} parent=1 // pred_check
      _
    $region35: #{tpu_custom_call.1} parent=1 // pred_check_branch
      %74 = sbr.rel (0) target = $region37
    $region36: #{tpu_custom_call.1} parent=1 // pred_region
      %75 = dma.done [#allocation6], 256
    $region37: #{tpu_custom_call.1} parent=1 // pred_fallthru
      _
    // Predicated region
    $region38: #{tpu_custom_call.1} parent=1 // pred_check
      _
    $region39: #{tpu_custom_call.1} parent=1 // pred_check_branch
      %77 = sbr.rel (0) target = $region41
    $region40: #{tpu_custom_call.1} parent=1 // pred_region
      %78 = dma.done [#allocation9], 6144
    $region41: #{tpu_custom_call.1} parent=1 // pred_fallthru
      _
    %v79 = vld [vmem:[#allocation5] sm:$0xff]
    %v80 = vld [vmem:[#allocation5 + $0x8] sm:$0xff]
    %v81 = vld [vmem:[#allocation5 + $0x10] sm:$0xff]
    %v82 = vld [vmem:[#allocation5 + $0x18] sm:$0xff]
    %v83 = vld [vmem:[#allocation5 + $0x20] sm:$0xff]
    %v84 = vld [vmem:[#allocation5 + $0x28] sm:$0xff]
    %v85 = vld [vmem:[#allocation5 + $0x30] sm:$0xff]
    %v86 = vld [vmem:[#allocation5 + $0x38] sm:$0xff]
    %v87 = vld [vmem:[#allocation5 + $0x40] sm:$0xff]
    %v88 = vld [vmem:[#allocation5 + $0x48] sm:$0xff]
    %v89 = vld [vmem:[#allocation5 + $0x50] sm:$0xff]
    %v90 = vld [vmem:[#allocation5 + $0x58] sm:$0xff]
    %v91 = vld [vmem:[#allocation5 + $0x60] sm:$0xff]
    %v92 = vld [vmem:[#allocation5 + $0x68] sm:$0xff]
    %v93 = vld [vmem:[#allocation5 + $0x70] sm:$0xff]
    %v94 = vld [vmem:[#allocation5 + $0x78] sm:$0xff]
    %v95 = vld [vmem:[#allocation5 + $0x80] sm:$0xff]
    %v96 = vld [vmem:[#allocation5 + $0x88] sm:$0xff]
    %v97 = vld [vmem:[#allocation5 + $0x90] sm:$0xff]
    %v98 = vld [vmem:[#allocation5 + $0x98] sm:$0xff]
    %v99 = vld [vmem:[#allocation5 + $0xa0] sm:$0xff]
    %v100 = vld [vmem:[#allocation5 + $0xa8] sm:$0xff]
    %v101 = vld [vmem:[#allocation5 + $0xb0] sm:$0xff]
    %v102 = vld [vmem:[#allocation5 + $0xb8] sm:$0xff]
    %v103 = vld [vmem:[#allocation5 + $0xc0] sm:$0xff]
    %v104 = vld [vmem:[#allocation5 + $0xc8] sm:$0xff]
    %v105 = vld [vmem:[#allocation5 + $0xd0] sm:$0xff]
    %v106 = vld [vmem:[#allocation5 + $0xd8] sm:$0xff]
    %v107 = vld [vmem:[#allocation5 + $0xe0] sm:$0xff]
    %v108 = vld [vmem:[#allocation5 + $0xe8] sm:$0xff]
    %v109 = vld [vmem:[#allocation5 + $0xf0] sm:$0xff]
    %v110 = vld [vmem:[#allocation5 + $0xf8] sm:$0xff]
    %v111 = vld [vmem:[#allocation2] sm:$0xff]
    %v112 = vld [vmem:[#allocation2 + $0x8] sm:$0xff]
    %v113 = vld [vmem:[#allocation2 + $0x10] sm:$0xff]
    %v114 = vld [vmem:[#allocation2 + $0x18] sm:$0xff]
    %v115 = vld [vmem:[#allocation2 + $0x20] sm:$0xff]
    %v116 = vld [vmem:[#allocation2 + $0x28] sm:$0xff]
    %v117 = vld [vmem:[#allocation2 + $0x30] sm:$0xff]
    %v118 = vld [vmem:[#allocation2 + $0x38] sm:$0xff]
    %v119 = vld [vmem:[#allocation2 + $0x40] sm:$0xff]
    %v120 = vld [vmem:[#allocation2 + $0x48] sm:$0xff]
    %v121 = vld [vmem:[#allocation2 + $0x50] sm:$0xff]
    %v122 = vld [vmem:[#allocation2 + $0x58] sm:$0xff]
    %v123 = vld [vmem:[#allocation2 + $0x60] sm:$0xff]
    %v124 = vld [vmem:[#allocation2 + $0x68] sm:$0xff]
    %v125 = vld [vmem:[#allocation2 + $0x70] sm:$0xff]
    %v126 = vld [vmem:[#allocation2 + $0x78] sm:$0xff]
    %v127 = vld [vmem:[#allocation2 + $0x80] sm:$0xff]
    %v128 = vld [vmem:[#allocation2 + $0x88] sm:$0xff]
    %v129 = vld [vmem:[#allocation2 + $0x90] sm:$0xff]
    %v130 = vld [vmem:[#allocation2 + $0x98] sm:$0xff]
    %v131 = vld [vmem:[#allocation2 + $0xa0] sm:$0xff]
    %v132 = vld [vmem:[#allocation2 + $0xa8] sm:$0xff]
    %v133 = vld [vmem:[#allocation2 + $0xb0] sm:$0xff]
    %v134 = vld [vmem:[#allocation2 + $0xb8] sm:$0xff]
    %v135 = vld [vmem:[#allocation2 + $0xc0] sm:$0xff]
    %v136 = vld [vmem:[#allocation2 + $0xc8] sm:$0xff]
    %v137 = vld [vmem:[#allocation2 + $0xd0] sm:$0xff]
    %v138 = vld [vmem:[#allocation2 + $0xd8] sm:$0xff]
    %v139 = vld [vmem:[#allocation2 + $0xe0] sm:$0xff]
    %v140 = vld [vmem:[#allocation2 + $0xe8] sm:$0xff]
    %v141 = vld [vmem:[#allocation2 + $0xf0] sm:$0xff]
    %v142 = vld [vmem:[#allocation2 + $0xf8] sm:$0xff]
    %143 = vmatprep.subr.mxu0 0.0
    %144 = vmatpush1.msra.mxu0 %v94
    %145 = vmatprep.subr.mxu0 0.0
    %146 = vmatpush1.msra.mxu0 %v93
    %147 = vmatprep.subr.mxu0 0.0
    %148 = vmatpush1.msra.mxu0 %v92
    %149 = vmatprep.subr.mxu0 0.0
    %150 = vmatpush1.msra.mxu0 %v91
    %151 = vmatprep.subr.mxu0 0.0
    %152 = vmatpush1.msra.mxu0 %v90
    %153 = vmatprep.subr.mxu0 0.0
    %154 = vmatpush1.msra.mxu0 %v89
    %155 = vmatprep.subr.mxu0 0.0
    %156 = vmatpush1.msra.mxu0 %v88
    %157 = vmatprep.subr.mxu0 0.0
    %158 = vmatpush1.msra.mxu0 %v87
    %159 = vmatprep.subr.mxu0 0.0
    %160 = vmatpush1.msra.mxu0 %v86
    %161 = vmatprep.subr.mxu0 0.0
    %162 = vmatpush1.msra.mxu0 %v85
    %163 = vmatprep.subr.mxu0 0.0
    %164 = vmatpush1.msra.mxu0 %v84
    %165 = vmatprep.subr.mxu0 0.0
    %166 = vmatpush1.msra.mxu0 %v83
    %167 = vmatprep.subr.mxu0 0.0
    %168 = vmatpush1.msra.mxu0 %v82
    %169 = vmatprep.subr.mxu0 0.0
    %170 = vmatpush1.msra.mxu0 %v81
    %171 = vmatprep.subr.mxu0 0.0
    %172 = vmatpush1.msra.mxu0 %v80
    %173 = vmatprep.subr.mxu0 0.0
    %174 = vmatpush1.msra.mxu0 %v79
    %175 = vmatprep.subr.mxu0 0.0
    %176 = vmatpush2.msra.mxu0 %v110
    %177 = vmatprep.subr.mxu0 0.0
    %178 = vmatpush2.msra.mxu0 %v109
    %179 = vmatprep.subr.mxu0 0.0
    %180 = vmatpush2.msra.mxu0 %v108
    %181 = vmatprep.subr.mxu0 0.0
    %182 = vmatpush2.msra.mxu0 %v107
    %183 = vmatprep.subr.mxu0 0.0
    %184 = vmatpush2.msra.mxu0 %v106
    %185 = vmatprep.subr.mxu0 0.0
    %186 = vmatpush2.msra.mxu0 %v105
    %187 = vmatprep.subr.mxu0 0.0
    %188 = vmatpush2.msra.mxu0 %v104
    %189 = vmatprep.subr.mxu0 0.0
    %190 = vmatpush2.msra.mxu0 %v103
    %191 = vmatprep.subr.mxu0 0.0
    %192 = vmatpush2.msra.mxu0 %v102
    %193 = vmatprep.subr.mxu0 0.0
    %194 = vmatpush2.msra.mxu0 %v101
    %195 = vmatprep.subr.mxu0 0.0
    %196 = vmatpush2.msra.mxu0 %v100
    %197 = vmatprep.subr.mxu0 0.0
    %198 = vmatpush2.msra.mxu0 %v99
    %199 = vmatprep.subr.mxu0 0.0
    %200 = vmatpush2.msra.mxu0 %v98
    %201 = vmatprep.subr.mxu0 0.0
    %202 = vmatpush2.msra.mxu0 %v97
    %203 = vmatprep.subr.mxu0 0.0
    %204 = vmatpush2.msra.mxu0 %v96
    %205 = vmatprep.subr.mxu0 0.0
    %206 = vmatpush2.msra.mxu0 %v95
    %207 = vmatprep.mubr.f32.mxu0 %v112
    %208 = vmatmul.mubr.f32.gmra.mxu0 %v111
    %v209 = vpop.f32.mrf.mxu0
    %v210 = vadd.f32 0.0, %v209
    %v211 = vpop.f32.mrf.mxu0
    %212 = vmatprep.mubr.f32.mxu0 %v114
    %213 = vmatmul.mubr.f32.gmra.mxu0 %v113
    %v214 = vpop.f32.mrf.mxu0
    %v215 = vadd.f32 0.0, %v214
    %v216 = vpop.f32.mrf.mxu0
    %217 = vmatprep.mubr.f32.mxu0 %v116
    %218 = vmatmul.mubr.f32.gmra.mxu0 %v115
    %v219 = vpop.f32.mrf.mxu0
    %v220 = vadd.f32 0.0, %v219
    %v221 = vpop.f32.mrf.mxu0
    %222 = vmatprep.mubr.f32.mxu0 %v118
    %223 = vmatmul.mubr.f32.gmra.mxu0 %v117
    %v224 = vpop.f32.mrf.mxu0
    %v225 = vadd.f32 0.0, %v224
    %v226 = vpop.f32.mrf.mxu0
    %227 = vmatprep.mubr.f32.mxu0 %v120
    %228 = vmatmul.mubr.f32.gmra.mxu0 %v119
    %v229 = vpop.f32.mrf.mxu0
    %v230 = vadd.f32 0.0, %v229
    %v231 = vpop.f32.mrf.mxu0
    %232 = vmatprep.mubr.f32.mxu0 %v122
    %233 = vmatmul.mubr.f32.gmra.mxu0 %v121
    %v234 = vpop.f32.mrf.mxu0
    %v235 = vadd.f32 0.0, %v234
    %v236 = vpop.f32.mrf.mxu0
    %237 = vmatprep.mubr.f32.mxu0 %v124
    %238 = vmatmul.mubr.f32.gmra.mxu0 %v123
    %v239 = vpop.f32.mrf.mxu0
    %v240 = vadd.f32 0.0, %v239
    %v241 = vpop.f32.mrf.mxu0
    %242 = vmatprep.mubr.f32.mxu0 %v126
    %243 = vmatmul.mubr.f32.gmra.mxu0 %v125
    %v244 = vpop.f32.mrf.mxu0
    %v245 = vadd.f32 0.0, %v244
    %v246 = vpop.f32.mrf.mxu0
    %247 = vmatprep.mubr.f32.mxu0 %v128
    %248 = vmatmul.mubr.f32.gmra.mxu0 %v127
    %v249 = vpop.f32.mrf.mxu0
    %v250 = vadd.f32 0.0, %v249
    %v251 = vpop.f32.mrf.mxu0
    %252 = vmatprep.mubr.f32.mxu0 %v130
    %253 = vmatmul.mubr.f32.gmra.mxu0 %v129
    %v254 = vpop.f32.mrf.mxu0
    %v255 = vadd.f32 0.0, %v254
    %v256 = vpop.f32.mrf.mxu0
    %257 = vmatprep.mubr.f32.mxu0 %v132
    %258 = vmatmul.mubr.f32.gmra.mxu0 %v131
    %v259 = vpop.f32.mrf.mxu0
    %v260 = vadd.f32 0.0, %v259
    %v261 = vpop.f32.mrf.mxu0
    %262 = vmatprep.mubr.f32.mxu0 %v134
    %263 = vmatmul.mubr.f32.gmra.mxu0 %v133
    %v264 = vpop.f32.mrf.mxu0
    %v265 = vadd.f32 0.0, %v264
    %v266 = vpop.f32.mrf.mxu0
    %267 = vmatprep.mubr.f32.mxu0 %v136
    %268 = vmatmul.mubr.f32.gmra.mxu0 %v135
    %v269 = vpop.f32.mrf.mxu0
    %v270 = vadd.f32 0.0, %v269
    %v271 = vpop.f32.mrf.mxu0
    %272 = vmatprep.mubr.f32.mxu0 %v138
    %273 = vmatmul.mubr.f32.gmra.mxu0 %v137
    %v274 = vpop.f32.mrf.mxu0
    %v275 = vadd.f32 0.0, %v274
    %v276 = vpop.f32.mrf.mxu0
    %277 = vmatprep.mubr.f32.mxu0 %v140
    %278 = vmatmul.mubr.f32.gmra.mxu0 %v139
    %v279 = vpop.f32.mrf.mxu0
    %v280 = vadd.f32 0.0, %v279
    %v281 = vpop.f32.mrf.mxu0
    %282 = vmatprep.mubr.f32.mxu0 %v142
    %283 = vmatmul.mubr.f32.gmra.mxu0 %v141
    %v284 = vpop.f32.mrf.mxu0
    %v285 = vadd.f32 0.0, %v284
    %v286 = vpop.f32.mrf.mxu0
    %287 = vdwg.mxu0
    %v288 = vld [vmem:[%s2] sm:$0x1]
    %v290 = vlaneseq
    %v291 = vshrl.u32 %v290, 7
    %v292 = vsub.s32 0, %v291
    %v293 = vrot.slane %v288, %v292
    %v295 = vadd.f32 %v210, %v293
    %v296 = vadd.f32 %v215, %v293
    %v297 = vadd.f32 %v220, %v293
    %v298 = vadd.f32 %v225, %v293
    %v299 = vadd.f32 %v230, %v293
    %v300 = vadd.f32 %v235, %v293
    %v301 = vadd.f32 %v240, %v293
    %v302 = vadd.f32 %v245, %v293
    %v303 = vadd.f32 %v250, %v293
    %v304 = vadd.f32 %v255, %v293
    %v305 = vadd.f32 %v260, %v293
    %v306 = vadd.f32 %v265, %v293
    %v307 = vadd.f32 %v270, %v293
    %v308 = vadd.f32 %v275, %v293
    %v309 = vadd.f32 %v280, %v293
    %v310 = vadd.f32 %v285, %v293
    %v311 = vmax.f32 %v295, 0.0
    %v312 = vmax.f32 %v296, 0.0
    %v313 = vmax.f32 %v297, 0.0
    %v314 = vmax.f32 %v298, 0.0
    %v315 = vmax.f32 %v299, 0.0
    %v316 = vmax.f32 %v300, 0.0
    %v317 = vmax.f32 %v301, 0.0
    %v318 = vmax.f32 %v302, 0.0
    %v319 = vmax.f32 %v303, 0.0
    %v320 = vmax.f32 %v304, 0.0
    %v321 = vmax.f32 %v305, 0.0
    %v322 = vmax.f32 %v306, 0.0
    %v323 = vmax.f32 %v307, 0.0
    %v324 = vmax.f32 %v308, 0.0
    %v325 = vmax.f32 %v309, 0.0
    %v326 = vmax.f32 %v310, 0.0
    %v327 = vld [vmem:[#allocation7] sm:$0xff]
    %v328 = vld [vmem:[#allocation7 + $0x8] sm:$0xff]
    %v329 = vmul.f32 %v311, %v327
    %v330 = vmul.f32 %v312, %v328
    %v331 = vmul.f32 %v313, %v327
    %v332 = vmul.f32 %v314, %v328
    %v333 = vmul.f32 %v315, %v327
    %v334 = vmul.f32 %v316, %v328
    %v335 = vmul.f32 %v317, %v327
    %v336 = vmul.f32 %v318, %v328
    %v337 = vmul.f32 %v319, %v327
    %v338 = vmul.f32 %v320, %v328
    %v339 = vmul.f32 %v321, %v327
    %v340 = vmul.f32 %v322, %v328
    %v341 = vmul.f32 %v323, %v327
    %v342 = vmul.f32 %v324, %v328
    %v343 = vmul.f32 %v325, %v327
    %v344 = vmul.f32 %v326, %v328
    %v345 = vmax.f32 %v329, %v330
    %v346 = vrot.slane %v345, 4
    %v347 = vmax.f32 %v345, %v346
    %v348 = vrot.slane %v347, 2
    %v349 = vmax.f32 %v347, %v348
    %v350 = vrot.slane %v349, 1
    %v351 = vmax.f32 %v349, %v350
    %v352 = vmax.f32 %v331, %v332
    %v353 = vrot.slane %v352, 4
    %v354 = vmax.f32 %v352, %v353
    %v355 = vrot.slane %v354, 2
    %v356 = vmax.f32 %v354, %v355
    %v357 = vrot.slane %v356, 1
    %v358 = vmax.f32 %v356, %v357
    %v359 = vmax.f32 %v333, %v334
    %v360 = vrot.slane %v359, 4
    %v361 = vmax.f32 %v359, %v360
    %v362 = vrot.slane %v361, 2
    %v363 = vmax.f32 %v361, %v362
    %v364 = vrot.slane %v363, 1
    %v365 = vmax.f32 %v363, %v364
    %v366 = vmax.f32 %v335, %v336
    %v367 = vrot.slane %v366, 4
    %v368 = vmax.f32 %v366, %v367
    %v369 = vrot.slane %v368, 2
    %v370 = vmax.f32 %v368, %v369
    %v371 = vrot.slane %v370, 1
    %v372 = vmax.f32 %v370, %v371
    %v373 = vmax.f32 %v337, %v338
    %v374 = vrot.slane %v373, 4
    %v375 = vmax.f32 %v373, %v374
    %v376 = vrot.slane %v375, 2
    %v377 = vmax.f32 %v375, %v376
    %v378 = vrot.slane %v377, 1
    %v379 = vmax.f32 %v377, %v378
    %v380 = vmax.f32 %v339, %v340
    %v381 = vrot.slane %v380, 4
    %v382 = vmax.f32 %v380, %v381
    %v383 = vrot.slane %v382, 2
    %v384 = vmax.f32 %v382, %v383
    %v385 = vrot.slane %v384, 1
    %v386 = vmax.f32 %v384, %v385
    %v387 = vmax.f32 %v341, %v342
    %v388 = vrot.slane %v387, 4
    %v389 = vmax.f32 %v387, %v388
    %v390 = vrot.slane %v389, 2
    %v391 = vmax.f32 %v389, %v390
    %v392 = vrot.slane %v391, 1
    %v393 = vmax.f32 %v391, %v392
    %v394 = vmax.f32 %v343, %v344
    %v395 = vrot.slane %v394, 4
    %v396 = vmax.f32 %v394, %v395
    %v397 = vrot.slane %v396, 2
    %v398 = vmax.f32 %v396, %v397
    %v399 = vrot.slane %v398, 1
    %v400 = vmax.f32 %v398, %v399
    %v401 = vld [vmem:[#allocation8] sm:$0xff]
    %v402 = vld [vmem:[#allocation8 + $0x8] sm:$0xff]
    %v403 = vld [vmem:[#allocation8 + $0x10] sm:$0xff]
    %v404 = vld [vmem:[#allocation8 + $0x18] sm:$0xff]
    %v405 = vld [vmem:[#allocation8 + $0x20] sm:$0xff]
    %v406 = vld [vmem:[#allocation8 + $0x28] sm:$0xff]
    %v407 = vld [vmem:[#allocation8 + $0x30] sm:$0xff]
    %v408 = vld [vmem:[#allocation8 + $0x38] sm:$0xff]
    %v409 = vld [vmem:[#allocation8 + $0x40] sm:$0xff]
    %v410 = vld [vmem:[#allocation8 + $0x48] sm:$0xff]
    %v411 = vld [vmem:[#allocation8 + $0x50] sm:$0xff]
    %v412 = vld [vmem:[#allocation8 + $0x58] sm:$0xff]
    %v413 = vld [vmem:[#allocation8 + $0x60] sm:$0xff]
    %v414 = vld [vmem:[#allocation8 + $0x68] sm:$0xff]
    %v415 = vld [vmem:[#allocation8 + $0x70] sm:$0xff]
    %v416 = vld [vmem:[#allocation8 + $0x78] sm:$0xff]
    %v417 = vld [vmem:[#allocation8 + $0x80] sm:$0xff]
    %v418 = vld [vmem:[#allocation8 + $0x88] sm:$0xff]
    %v419 = vld [vmem:[#allocation8 + $0x90] sm:$0xff]
    %v420 = vld [vmem:[#allocation8 + $0x98] sm:$0xff]
    %v421 = vld [vmem:[#allocation8 + $0xa0] sm:$0xff]
    %v422 = vld [vmem:[#allocation8 + $0xa8] sm:$0xff]
    %v423 = vld [vmem:[#allocation8 + $0xb0] sm:$0xff]
    %v424 = vld [vmem:[#allocation8 + $0xb8] sm:$0xff]
    %v425 = vld [vmem:[#allocation8 + $0xc0] sm:$0xff]
    %v426 = vld [vmem:[#allocation8 + $0xc8] sm:$0xff]
    %v427 = vld [vmem:[#allocation8 + $0xd0] sm:$0xff]
    %v428 = vld [vmem:[#allocation8 + $0xd8] sm:$0xff]
    %v429 = vld [vmem:[#allocation8 + $0xe0] sm:$0xff]
    %v430 = vld [vmem:[#allocation8 + $0xe8] sm:$0xff]
    %v431 = vld [vmem:[#allocation8 + $0xf0] sm:$0xff]
    %v432 = vld [vmem:[#allocation8 + $0xf8] sm:$0xff]
    %v433 = vld [vmem:[#allocation8 + $0x100] sm:$0xff]
    %v434 = vld [vmem:[#allocation8 + $0x108] sm:$0xff]
    %v435 = vld [vmem:[#allocation8 + $0x110] sm:$0xff]
    %v436 = vld [vmem:[#allocation8 + $0x118] sm:$0xff]
    %v437 = vld [vmem:[#allocation8 + $0x120] sm:$0xff]
    %v438 = vld [vmem:[#allocation8 + $0x128] sm:$0xff]
    %v439 = vld [vmem:[#allocation8 + $0x130] sm:$0xff]
    %v440 = vld [vmem:[#allocation8 + $0x138] sm:$0xff]
    %v441 = vld [vmem:[#allocation8 + $0x140] sm:$0xff]
    %v442 = vld [vmem:[#allocation8 + $0x148] sm:$0xff]
    %v443 = vld [vmem:[#allocation8 + $0x150] sm:$0xff]
    %v444 = vld [vmem:[#allocation8 + $0x158] sm:$0xff]
    %v445 = vld [vmem:[#allocation8 + $0x160] sm:$0xff]
    %v446 = vld [vmem:[#allocation8 + $0x168] sm:$0xff]
    %v447 = vld [vmem:[#allocation8 + $0x170] sm:$0xff]
    %v448 = vld [vmem:[#allocation8 + $0x178] sm:$0xff]
    %v449 = vld [vmem:[%s5] sm:$0x7]
    %v450 = vlaneseq
    %v451 = vshrl.u32 %v450, 7
    %v452 = vsub.s32 0, %v451
    %v453 = vrot.slane %v449, %v452
    %vm462 = vcmask 1041409
    %v463 = vsel %vm462, %v358, %v351
    %vm464 = vcmask 1042434
    %v465 = vsel %vm464, %v365, %v463
    %vm466 = vcmask 1043459
    %v467 = vsel %vm466, %v372, %v465
    %vm468 = vcmask 1044484
    %v469 = vsel %vm468, %v379, %v467
    %vm470 = vcmask 1045509
    %v471 = vsel %vm470, %v386, %v469
    %vm472 = vcmask 1046534
    %v473 = vsel %vm472, %v393, %v471
    %vm474 = vcmask 1047559
    %v475 = vsel %vm474, %v400, %v473
    %477 = vmatprep.subr.mxu0 0.0
    %478 = vmatpush1.msra.mxu0 %v416
    %479 = vmatprep.subr.mxu0 0.0
    %480 = vmatpush1.msra.mxu0 %v415
    %481 = vmatprep.subr.mxu0 0.0
    %482 = vmatpush1.msra.mxu0 %v414
    %483 = vmatprep.subr.mxu0 0.0
    %484 = vmatpush1.msra.mxu0 %v413
    %485 = vmatprep.subr.mxu0 0.0
    %486 = vmatpush1.msra.mxu0 %v412
    %487 = vmatprep.subr.mxu0 0.0
    %488 = vmatpush1.msra.mxu0 %v411
    %489 = vmatprep.subr.mxu0 0.0
    %490 = vmatpush1.msra.mxu0 %v410
    %491 = vmatprep.subr.mxu0 0.0
    %492 = vmatpush1.msra.mxu0 %v409
    %493 = vmatprep.subr.mxu0 0.0
    %494 = vmatpush1.msra.mxu0 %v408
    %495 = vmatprep.subr.mxu0 0.0
    %496 = vmatpush1.msra.mxu0 %v407
    %497 = vmatprep.subr.mxu0 0.0
    %498 = vmatpush1.msra.mxu0 %v406
    %499 = vmatprep.subr.mxu0 0.0
    %500 = vmatpush1.msra.mxu0 %v405
    %501 = vmatprep.subr.mxu0 0.0
    %502 = vmatpush1.msra.mxu0 %v404
    %503 = vmatprep.subr.mxu0 0.0
    %504 = vmatpush1.msra.mxu0 %v403
    %505 = vmatprep.subr.mxu0 0.0
    %506 = vmatpush1.msra.mxu0 %v402
    %507 = vmatprep.subr.mxu0 0.0
    %508 = vmatpush1.msra.mxu0 %v401
    %509 = vmatprep.subr.mxu0 0.0
    %510 = vmatpush2.msra.mxu0 0.0
    %511 = vmatprep.subr.mxu0 0.0
    %512 = vmatpush2.msra.mxu0 0.0
    %513 = vmatprep.subr.mxu0 0.0
    %514 = vmatpush2.msra.mxu0 0.0
    %515 = vmatprep.subr.mxu0 0.0
    %516 = vmatpush2.msra.mxu0 0.0
    %517 = vmatprep.subr.mxu0 0.0
    %518 = vmatpush2.msra.mxu0 0.0
    %519 = vmatprep.subr.mxu0 0.0
    %520 = vmatpush2.msra.mxu0 0.0
    %521 = vmatprep.subr.mxu0 0.0
    %522 = vmatpush2.msra.mxu0 0.0
    %523 = vmatprep.subr.mxu0 0.0
    %524 = vmatpush2.msra.mxu0 0.0
    %525 = vmatprep.subr.mxu0 0.0
    %526 = vmatpush2.msra.mxu0 0.0
    %527 = vmatprep.subr.mxu0 0.0
    %528 = vmatpush2.msra.mxu0 0.0
    %529 = vmatprep.subr.mxu0 0.0
    %530 = vmatpush2.msra.mxu0 0.0
    %531 = vmatprep.subr.mxu0 0.0
    %532 = vmatpush2.msra.mxu0 0.0
    %533 = vmatprep.subr.mxu0 0.0
    %534 = vmatpush2.msra.mxu0 0.0
    %535 = vmatprep.subr.mxu0 0.0
    %536 = vmatpush2.msra.mxu0 0.0
    %537 = vmatprep.subr.mxu0 0.0
    %538 = vmatpush2.msra.mxu0 0.0
    %539 = vmatprep.subr.mxu0 0.0
    %540 = vmatpush2.msra.mxu0 0.0
    %541 = vmatprep.mubr.f32.mxu0 0.0
    %542 = vmatmul.mubr.f32.gmra.mxu0 %v475
    %v543 = vpop.f32.mrf.mxu0
    %v544 = vadd.f32 %v453, %v543
    %v545 = vpop.f32.mrf.mxu0
    %546 = vdwg.mxu0
    %v547 = vmax.f32 %v544, 0.0
    %v548 = vlaneseq
    %v549 = vshrl.u32 %v548, 7
    %v550 = vsub.s32 1, %v549
    %v551 = vrot.slane %v449, %v550
    %552 = vmatprep.subr.mxu0 0.0
    %553 = vmatpush1.msra.mxu0 %v432
    %554 = vmatprep.subr.mxu0 0.0
    %555 = vmatpush1.msra.mxu0 %v431
    %556 = vmatprep.subr.mxu0 0.0
    %557 = vmatpush1.msra.mxu0 %v430
    %558 = vmatprep.subr.mxu0 0.0
    %559 = vmatpush1.msra.mxu0 %v429
    %560 = vmatprep.subr.mxu0 0.0
    %561 = vmatpush1.msra.mxu0 %v428
    %562 = vmatprep.subr.mxu0 0.0
    %563 = vmatpush1.msra.mxu0 %v427
    %564 = vmatprep.subr.mxu0 0.0
    %565 = vmatpush1.msra.mxu0 %v426
    %566 = vmatprep.subr.mxu0 0.0
    %567 = vmatpush1.msra.mxu0 %v425
    %568 = vmatprep.subr.mxu0 0.0
    %569 = vmatpush1.msra.mxu0 %v424
    %570 = vmatprep.subr.mxu0 0.0
    %571 = vmatpush1.msra.mxu0 %v423
    %572 = vmatprep.subr.mxu0 0.0
    %573 = vmatpush1.msra.mxu0 %v422
    %574 = vmatprep.subr.mxu0 0.0
    %575 = vmatpush1.msra.mxu0 %v421
    %576 = vmatprep.subr.mxu0 0.0
    %577 = vmatpush1.msra.mxu0 %v420
    %578 = vmatprep.subr.mxu0 0.0
    %579 = vmatpush1.msra.mxu0 %v419
    %580 = vmatprep.subr.mxu0 0.0
    %581 = vmatpush1.msra.mxu0 %v418
    %582 = vmatprep.subr.mxu0 0.0
    %583 = vmatpush1.msra.mxu0 %v417
    %584 = vmatprep.subr.mxu0 0.0
    %585 = vmatpush2.msra.mxu0 0.0
    %586 = vmatprep.subr.mxu0 0.0
    %587 = vmatpush2.msra.mxu0 0.0
    %588 = vmatprep.subr.mxu0 0.0
    %589 = vmatpush2.msra.mxu0 0.0
    %590 = vmatprep.subr.mxu0 0.0
    %591 = vmatpush2.msra.mxu0 0.0
    %592 = vmatprep.subr.mxu0 0.0
    %593 = vmatpush2.msra.mxu0 0.0
    %594 = vmatprep.subr.mxu0 0.0
    %595 = vmatpush2.msra.mxu0 0.0
    %596 = vmatprep.subr.mxu0 0.0
    %597 = vmatpush2.msra.mxu0 0.0
    %598 = vmatprep.subr.mxu0 0.0
    %599 = vmatpush2.msra.mxu0 0.0
    %600 = vmatprep.subr.mxu0 0.0
    %601 = vmatpush2.msra.mxu0 0.0
    %602 = vmatprep.subr.mxu0 0.0
    %603 = vmatpush2.msra.mxu0 0.0
    %604 = vmatprep.subr.mxu0 0.0
    %605 = vmatpush2.msra.mxu0 0.0
    %606 = vmatprep.subr.mxu0 0.0
    %607 = vmatpush2.msra.mxu0 0.0
    %608 = vmatprep.subr.mxu0 0.0
    %609 = vmatpush2.msra.mxu0 0.0
    %610 = vmatprep.subr.mxu0 0.0
    %611 = vmatpush2.msra.mxu0 0.0
    %612 = vmatprep.subr.mxu0 0.0
    %613 = vmatpush2.msra.mxu0 0.0
    %614 = vmatprep.subr.mxu0 0.0
    %615 = vmatpush2.msra.mxu0 0.0
    %616 = vmatprep.mubr.f32.mxu0 0.0
    %617 = vmatmul.mubr.f32.gmra.mxu0 %v547
    %v618 = vpop.f32.mrf.mxu0
    %v619 = vadd.f32 %v551, %v618
    %v620 = vpop.f32.mrf.mxu0
    %621 = vdwg.mxu0
    %v622 = vmax.f32 %v619, 0.0
    %v623 = vlaneseq
    %v624 = vshrl.u32 %v623, 7
    %v625 = vsub.s32 2, %v624
    %v626 = vrot.slane %v449, %v625
    %627 = vmatprep.subr.mxu0 0.0
    %628 = vmatpush1.msra.mxu0 %v448
    %629 = vmatprep.subr.mxu0 0.0
    %630 = vmatpush1.msra.mxu0 %v447
    %631 = vmatprep.subr.mxu0 0.0
    %632 = vmatpush1.msra.mxu0 %v446
    %633 = vmatprep.subr.mxu0 0.0
    %634 = vmatpush1.msra.mxu0 %v445
    %635 = vmatprep.subr.mxu0 0.0
    %636 = vmatpush1.msra.mxu0 %v444
    %637 = vmatprep.subr.mxu0 0.0
    %638 = vmatpush1.msra.mxu0 %v443
    %639 = vmatprep.subr.mxu0 0.0
    %640 = vmatpush1.msra.mxu0 %v442
    %641 = vmatprep.subr.mxu0 0.0
    %642 = vmatpush1.msra.mxu0 %v441
    %643 = vmatprep.subr.mxu0 0.0
    %644 = vmatpush1.msra.mxu0 %v440
    %645 = vmatprep.subr.mxu0 0.0
    %646 = vmatpush1.msra.mxu0 %v439
    %647 = vmatprep.subr.mxu0 0.0
    %648 = vmatpush1.msra.mxu0 %v438
    %649 = vmatprep.subr.mxu0 0.0
    %650 = vmatpush1.msra.mxu0 %v437
    %651 = vmatprep.subr.mxu0 0.0
    %652 = vmatpush1.msra.mxu0 %v436
    %653 = vmatprep.subr.mxu0 0.0
    %654 = vmatpush1.msra.mxu0 %v435
    %655 = vmatprep.subr.mxu0 0.0
    %656 = vmatpush1.msra.mxu0 %v434
    %657 = vmatprep.subr.mxu0 0.0
    %658 = vmatpush1.msra.mxu0 %v433
    %659 = vmatprep.subr.mxu0 0.0
    %660 = vmatpush2.msra.mxu0 0.0
    %661 = vmatprep.subr.mxu0 0.0
    %662 = vmatpush2.msra.mxu0 0.0
    %663 = vmatprep.subr.mxu0 0.0
    %664 = vmatpush2.msra.mxu0 0.0
    %665 = vmatprep.subr.mxu0 0.0
    %666 = vmatpush2.msra.mxu0 0.0
    %667 = vmatprep.subr.mxu0 0.0
    %668 = vmatpush2.msra.mxu0 0.0
    %669 = vmatprep.subr.mxu0 0.0
    %670 = vmatpush2.msra.mxu0 0.0
    %671 = vmatprep.subr.mxu0 0.0
    %672 = vmatpush2.msra.mxu0 0.0
    %673 = vmatprep.subr.mxu0 0.0
    %674 = vmatpush2.msra.mxu0 0.0
    %675 = vmatprep.subr.mxu0 0.0
    %676 = vmatpush2.msra.mxu0 0.0
    %677 = vmatprep.subr.mxu0 0.0
    %678 = vmatpush2.msra.mxu0 0.0
    %679 = vmatprep.subr.mxu0 0.0
    %680 = vmatpush2.msra.mxu0 0.0
    %681 = vmatprep.subr.mxu0 0.0
    %682 = vmatpush2.msra.mxu0 0.0
    %683 = vmatprep.subr.mxu0 0.0
    %684 = vmatpush2.msra.mxu0 0.0
    %685 = vmatprep.subr.mxu0 0.0
    %686 = vmatpush2.msra.mxu0 0.0
    %687 = vmatprep.subr.mxu0 0.0
    %688 = vmatpush2.msra.mxu0 0.0
    %689 = vmatprep.subr.mxu0 0.0
    %690 = vmatpush2.msra.mxu0 0.0
    %691 = vmatprep.mubr.f32.mxu0 0.0
    %692 = vmatmul.mubr.f32.gmra.mxu0 %v622
    %v693 = vpop.f32.mrf.mxu0
    %v694 = vadd.f32 %v626, %v693
    %v695 = vpop.f32.mrf.mxu0
    %696 = vdwg.mxu0
    %697 = vst [vmem:[#allocation10] sm:$0xff] %v694
    // Predicated region
    $region42: #{tpu_custom_call.1} parent=1 // pred_check
      _
    $region43: #{tpu_custom_call.1} parent=1 // pred_check_branch
      %699 = sbr.rel (0) target = $region45
    $region44: #{tpu_custom_call.1} parent=1 // pred_region
      %s701 = ssub.s32 128, 128
      %702 = vsyncadd [#allocation4], %s701
      %s704 = sshll.u32 [#allocation10], 4
      %s705 = int_to_ptr.vmem [resolvable:$true] %s704
      %707 = dma.vmem_to_hbm [thread:$0]  %s705, 128, %s6, [#allocation4]
    $region45: #{tpu_custom_call.1} parent=1 // pred_fallthru
      _
    // Predicated region
    $region46: #{tpu_custom_call.1} parent=1 // pred_check
      _
    $region47: #{tpu_custom_call.1} parent=1 // pred_check_branch
      %709 = sbr.rel (0) target = $region49
    $region48: #{tpu_custom_call.1} parent=1 // pred_region
      %710 = dma.done [#allocation4], 128
    $region49: #{tpu_custom_call.1} parent=1 // pred_fallthru
      _
    %711 = vsyncpa [#allocation3], 1
    %712 = vsyncpa [#allocation6], 1
    %713 = vsyncpa [#allocation9], 1
    %714 = vsyncpa [#allocation4], 1

</llo_original>
